<compile_context>
chip_gen: v7x
topology: tpu7x:2x2x1
jax: 0.10.0
libtpu: 0.0.40
codegen_flags: <defaults>
</compile_context>

<pallas_src>
import jax
import jax.numpy as jnp
from jax.experimental import pallas as pl
from jax.experimental.pallas import tpu as pltpu


# ---------------------------------------------------------------------------
# Kernel
# ---------------------------------------------------------------------------
def deepgp_kernel(x_ref, p_ref, out_ref):
    # x: (1, TM)  -- batch on the lane axis (lane-dense).
    x = x_ref[...]

    # ---- unpack the packed parameter slab (all static slices) --------------
    w1 = p_ref[0:60, 0:1]        # (60, 1)  stacked [W1; W21]
    b1 = p_ref[0:60, 1:2]        # (60, 1)  stacked [b1; b21]
    w2 = p_ref[0:12, 64:124]     # (12, 60) block-diag(W2, W22)
    b2 = p_ref[0:12, 124:125]    # (12, 1)  stacked [b2; b22]
    w3 = p_ref[60:62, 0:12]      # (2, 12)  block-diag(W3, W23)
    b3 = p_ref[60:62, 16:17]     # (2, 1)   stacked [b3; b23]
    scale = p_ref[60:61, 20:21]  # (1, 1)

    # ---- fused dual-branch MLP: 1 -> 30(+30) -> 6(+6) -> 1(+1) -------------
    # layer 1 (in_features == 1): broadcast FMA on the VPU, result (60, TM).
    h = jnp.tanh(w1 * x + b1)                                               # (60, TM)
    # layer 2: block-diagonal lane-dense matmul, result (12, TM).
    h = jnp.tanh(jnp.dot(w2, h, preferred_element_type=jnp.float32) + b2)   # (12, TM)
    # layer 3: block-diagonal lane-dense matmul, result (2, TM).
    h = jnp.dot(w3, h, preferred_element_type=jnp.float32) + b3             # (2, TM)

    # row 0 (branch 1): scale * sigmoid(.) ; row 1 (branch 2): identity.
    row = jax.lax.broadcasted_iota(jnp.int32, h.shape, 0)
    out_ref[...] = jnp.where(row == 0, scale * jax.nn.sigmoid(h), h)


# ---------------------------------------------------------------------------
# Wrapper
# ---------------------------------------------------------------------------
def deepgp_forward(x_train, param_slab, *, tile_m=512):
    """DeepGP feature map.

    x_train: (N, 1) or (N,) float32.
    param_slab: (64, 128) float32 packed parameters (see pack_params).
    Returns (N, 2) float32, equal to torch.cat((h11, h12), 1).
    """
    n = x_train.shape[0]
    x_flat = x_train.reshape(1, n).astype(jnp.float32)   # batch on lane axis

    tile_m = max(128, int(tile_m))
    n_pad = ((n + tile_m - 1) // tile_m) * tile_m
    if n_pad != n:
        x_flat = jnp.pad(x_flat, ((0, 0), (0, n_pad - n)))

    grid = (n_pad // tile_m,)

    out_t = pl.pallas_call(
        deepgp_kernel,
        out_shape=jax.ShapeDtypeStruct((2, n_pad), jnp.float32),
        grid_spec=pltpu.PrefetchScalarGridSpec(
            num_scalar_prefetch=0,
            grid=grid,
            in_specs=[
                # x tile: (1, TM), lane-dense batch.
                pl.BlockSpec((1, tile_m), lambda i: (0, i)),
                # one packed parameter slab, resident for every grid step.
                pl.BlockSpec((64, 128), lambda i: (0, 0)),
            ],
            # lane-dense (2, TM) output block, written with one full store.
            out_specs=pl.BlockSpec((2, tile_m), lambda i: (0, i)),
        ),
        compiler_params=pltpu.CompilerParams(
            dimension_semantics=("parallel",)),
    )(x_flat, param_slab)

    # back to PyTorch layout: (N, 2)
    return out_t[:, :n].T


# ---------------------------------------------------------------------------
# Parameters
# ---------------------------------------------------------------------------
def init_params(key):
    """Deterministic init mimicking torch.nn.Linear (uniform +-1/sqrt(fan_in)).

    Weights are kept in PyTorch layout (out_features, in_features).
    """
    def linear(k, fan_in, fan_out):
        kw, kb = jax.random.split(k)
        bound = 1.0 / float(fan_in) ** 0.5
        w = jax.random.uniform(kw, (fan_out, fan_in), jnp.float32, -bound, bound)
        b = jax.random.uniform(kb, (fan_out,), jnp.float32, -bound, bound)
        return w, b

    ks = jax.random.split(key, 6)
    p = {}
    p["W1"], p["b1"] = linear(ks[0], 1, 30)
    p["W2"], p["b2"] = linear(ks[1], 30, 6)
    p["W3"], p["b3"] = linear(ks[2], 6, 1)
    p["W21"], p["b21"] = linear(ks[3], 1, 30)
    p["W22"], p["b22"] = linear(ks[4], 30, 6)
    p["W23"], p["b23"] = linear(ks[5], 6, 1)
    p["scale"] = jnp.ones((1,), jnp.float32)      # torch.nn.Parameter([1.0])
    return p


def pack_params(p):
    """Pack all parameters into one (8,128)-aligned f32 slab, with the two
    branches fused into stacked / block-diagonal weights."""
    slab = jnp.zeros((64, 128), jnp.float32)

    # stacked layer-1 weight/bias: (60, 1)
    w1s = jnp.concatenate([p["W1"], p["W21"]], axis=0)                  # (60, 1)
    b1s = jnp.concatenate([p["b1"], p["b21"]], axis=0).reshape(60, 1)   # (60, 1)
    slab = slab.at[0:60, 0:1].set(w1s)
    slab = slab.at[0:60, 1:2].set(b1s)

    # block-diagonal layer-2 weight (12, 60) + stacked bias (12, 1)
    w2b = jnp.zeros((12, 60), jnp.float32)
    w2b = w2b.at[0:6, 0:30].set(p["W2"])
    w2b = w2b.at[6:12, 30:60].set(p["W22"])
    b2s = jnp.concatenate([p["b2"], p["b22"]], axis=0).reshape(12, 1)
    slab = slab.at[0:12, 64:124].set(w2b)
    slab = slab.at[0:12, 124:125].set(b2s)

    # block-diagonal layer-3 weight (2, 12) + stacked bias (2, 1) + scale
    w3b = jnp.zeros((2, 12), jnp.float32)
    w3b = w3b.at[0:1, 0:6].set(p["W3"])
    w3b = w3b.at[1:2, 6:12].set(p["W23"])
    b3s = jnp.stack([p["b3"][0], p["b23"][0]]).reshape(2, 1)
    slab = slab.at[60:62, 0:12].set(w3b)
    slab = slab.at[60:62, 16:17].set(b3s)
    slab = slab.at[60, 20].set(p["scale"][0])
    return slab


# ---------------------------------------------------------------------------
# Pure-JAX reference (matches the PyTorch forward, y_train=None path)
# ---------------------------------------------------------------------------
def reference_forward(x, p):
    h = jnp.tanh(x @ p["W1"].T + p["b1"])
    h = jnp.tanh(h @ p["W2"].T + p["b2"])
    h = jax.nn.sigmoid(h @ p["W3"].T + p["b3"])
    h11 = p["scale"][0] * h
    g = jnp.tanh(x @ p["W21"].T + p["b21"])
    g = jnp.tanh(g @ p["W22"].T + p["b22"])
    h12 = g @ p["W23"].T + p["b23"]
    return jnp.concatenate([h11, h12], axis=1)


if __name__ == "__main__":
    key = jax.random.PRNGKey(0)
    kx, kp = jax.random.split(key)

    N = 256                                      # batch of training points
    x_train = jax.random.normal(kx, (N, 1), jnp.float32)

    params = init_params(kp)
    slab = pack_params(params)

    # tile_m=128 -> grid of 2 parallel steps (keeps both v7x TensorCores busy
    # at this small N; at large N raise tile_m to 512-2048 to amortize
    # per-grid-step overhead -- the kernel is HBM-bound).
    out = deepgp_forward(x_train, slab, tile_m=128)
    out = jax.block_until_ready(out)

    ref = reference_forward(x_train, params)
    assert out.shape == (N, 2)
    assert jnp.allclose(out, ref, atol=1e-4, rtol=1e-4)

    print("KERNEL_OK")
</pallas_src>

<mosaic_0001>
module attributes {stable_mosaic.version = 11 : i64} {
  func.func @deepgp_kernel(%arg0: i32, %arg1: memref<1x128xf32, #tpu.memory_space<vmem>>, %arg2: memref<64x128xf32, #tpu.memory_space<vmem>>, %arg3: memref<2x128xf32, #tpu.memory_space<vmem>>) attributes {dimension_semantics = [#tpu.dimension_semantics<parallel>], iteration_bounds = array<i64: 2>, scalar_prefetch = 0 : i64, scratch_operands = 0 : i64, tpu.core_type = #tpu.core_type<tc>, window_params = [{transform_indices = @transform_0, window_bounds = array<i64: 1, 128>}, {pipeline_mode = #tpu.pipeline_mode<synchronous>, transform_indices = @transform_1, window_bounds = array<i64: 64, 128>}, {transform_indices = @transform_2, window_bounds = array<i64: 2, 128>}]} {
    %c0 = arith.constant 0 : index
    %c0_0 = arith.constant 0 : index
    %0 = vector.load %arg1[%c0, %c0_0] : memref<1x128xf32, #tpu.memory_space<vmem>>, vector<1x128xf32>
    %c0_1 = arith.constant 0 : index
    %c0_2 = arith.constant 0 : index
    %1 = vector.load %arg2[%c0_1, %c0_2] : memref<64x128xf32, #tpu.memory_space<vmem>>, vector<60x1xf32>
    %c0_3 = arith.constant 0 : index
    %c1 = arith.constant 1 : index
    %2 = vector.load %arg2[%c0_3, %c1] : memref<64x128xf32, #tpu.memory_space<vmem>>, vector<60x1xf32>
    %c0_4 = arith.constant 0 : index
    %c64 = arith.constant 64 : index
    %3 = vector.load %arg2[%c0_4, %c64] : memref<64x128xf32, #tpu.memory_space<vmem>>, vector<12x60xf32>
    %c0_5 = arith.constant 0 : index
    %c124 = arith.constant 124 : index
    %4 = vector.load %arg2[%c0_5, %c124] : memref<64x128xf32, #tpu.memory_space<vmem>>, vector<12x1xf32>
    %c60 = arith.constant 60 : index
    %c0_6 = arith.constant 0 : index
    %5 = vector.load %arg2[%c60, %c0_6] : memref<64x128xf32, #tpu.memory_space<vmem>>, vector<2x12xf32>
    %c60_7 = arith.constant 60 : index
    %c16 = arith.constant 16 : index
    %6 = vector.load %arg2[%c60_7, %c16] : memref<64x128xf32, #tpu.memory_space<vmem>>, vector<2x1xf32>
    %c60_8 = arith.constant 60 : index
    %c20 = arith.constant 20 : index
    %7 = vector.load %arg2[%c60_8, %c20] : memref<64x128xf32, #tpu.memory_space<vmem>>, vector<1x1xf32>
    %8 = vector.broadcast %1 : vector<60x1xf32> to vector<60x128xf32>
    %9 = vector.broadcast %0 : vector<1x128xf32> to vector<60x128xf32>
    %10 = arith.mulf %8, %9 : vector<60x128xf32>
    %11 = vector.broadcast %2 : vector<60x1xf32> to vector<60x128xf32>
    %12 = arith.addf %10, %11 : vector<60x128xf32>
    %13 = math.tanh %12 : vector<60x128xf32>
    %cst = arith.constant dense<0.000000e+00> : vector<12x128xf32>
    %14 = tpu.matmul %3, %13, %cst {dimension_numbers = #tpu.dot_dimension_numbers<[1], [0], [0], [1], [0, 0, 1, 1], [], []>} : vector<12x60xf32>, vector<60x128xf32>, vector<12x128xf32> -> vector<12x128xf32>
    %15 = vector.broadcast %4 : vector<12x1xf32> to vector<12x128xf32>
    %16 = arith.addf %14, %15 : vector<12x128xf32>
    %17 = math.tanh %16 : vector<12x128xf32>
    %cst_9 = arith.constant dense<0.000000e+00> : vector<2x128xf32>
    %18 = tpu.matmul %5, %17, %cst_9 {dimension_numbers = #tpu.dot_dimension_numbers<[1], [0], [0], [1], [0, 0, 1, 1], [], []>} : vector<2x12xf32>, vector<12x128xf32>, vector<2x128xf32> -> vector<2x128xf32>
    %19 = vector.broadcast %6 : vector<2x1xf32> to vector<2x128xf32>
    %20 = arith.addf %18, %19 : vector<2x128xf32>
    %21 = tpu.iota {dimensions = array<i32: 0>} : vector<2x128xi32>
    %c0_i32 = arith.constant 0 : i32
    %22 = vector.broadcast %c0_i32 : i32 to vector<2x128xi32>
    %23 = arith.cmpi eq, %21, %22 : vector<2x128xi32>
    %24 = arith.negf %20 : vector<2x128xf32>
    %25 = math.exp %24 : vector<2x128xf32>
    %cst_10 = arith.constant 1.000000e+00 : f32
    %26 = vector.broadcast %cst_10 : f32 to vector<2x128xf32>
    %27 = arith.addf %26, %25 : vector<2x128xf32>
    %28 = arith.divf %26, %27 : vector<2x128xf32>
    %29 = vector.broadcast %7 : vector<1x1xf32> to vector<2x128xf32>
    %30 = arith.mulf %29, %28 : vector<2x128xf32>
    %31 = arith.select %23, %30, %20 : vector<2x128xi1>, vector<2x128xf32>
    %c0_11 = arith.constant 0 : index
    %c0_12 = arith.constant 0 : index
    %32 = vector.load %arg3[%c0_11, %c0_12] : memref<2x128xf32, #tpu.memory_space<vmem>>, vector<2x128xf32>
    tpu.vector_store %arg3[%c0_11, %c0_12], %31 {strides = array<i32>} : memref<2x128xf32, #tpu.memory_space<vmem>>, vector<2x128xf32>,
    return
  }
  func.func @transform_0(%arg0: i32) -> (i32, i32) {
    %c0_i32 = arith.constant 0 : i32
    %c0_i32_0 = arith.constant 0 : i32
    return %c0_i32, %arg0 : i32, i32
  }
  func.func @transform_1(%arg0: i32) -> (i32, i32) {
    %c0_i32 = arith.constant 0 : i32
    %c0_i32_0 = arith.constant 0 : i32
    %c0_i32_1 = arith.constant 0 : i32
    return %c0_i32, %c0_i32_0 : i32, i32
  }
  func.func @transform_2(%arg0: i32) -> (i32, i32) {
    %c0_i32 = arith.constant 0 : i32
    %c0_i32_0 = arith.constant 0 : i32
    return %c0_i32, %arg0 : i32, i32
  }
}

</mosaic_0001>

<llo_original>
// kernel: tpu_custom_call.1
$region0: #{tpu_custom_call.1}
  #allocation0 [shape = 'u32[]', space=smem, size = 0x4, offset = 0x4, fixed_abs, tag = 'smem constant byte address 0x4 - core index']
  #allocation1 [shape = 'u32[144,128]{1,0:T(1,128)}', space=vmem, size = 0x12000, scoped, tag = 'internal scratch']
  %s0 = inlined_call_operand.hbm [shape: f32[1,256], index: 0, kind: input, shape index: {}]
  %s1 = inlined_call_operand.hbm [shape: f32[64,128], index: 1, kind: input, shape index: {}]
  %s2 = inlined_call_operand.hbm [shape: f32[2,256], index: 2, kind: output, shape index: {}]
  %s3 = sld [smem:[#allocation0]]
  $region49: #{tpu_custom_call.1} parent=0
    _
  %s5 = ssub.s32 1, %s3
  %s6 = scalar_select 0, %s5, %s3
  $region1: #{tpu_custom_call.1} parent=0
    #allocation2 [shape = 'u8[1024]{0}', space=vmem, size = 0x400, scoped, tag = 'input window, operand 0']
    #allocation3 [shape = 's32[2]{0}', space=sflag, size = 0x8, scoped, tag = 'scoped memory for tpu_custom_call.1']
    #allocation4 [shape = 's32[2]{0}', space=sflag, size = 0x8, scoped, tag = 'scoped memory for tpu_custom_call.1']
    #allocation5 [shape = 'u8[32768]{0}', space=vmem, size = 0x8000, scoped, tag = 'input window, operand 1, single buffered']
    #allocation6 [shape = 's32[1]{0}', space=sflag, size = 0x4, scoped, tag = 'scoped memory for tpu_custom_call.1']
    #allocation7 [shape = 'u8[2048]{0}', space=vmem, size = 0x800, scoped, tag = 'output window, operand 0']
    %7 = vsyncpa [#allocation3], 0
    %s8 = scalar_lea.sflag [#allocation3], 1
    %9 = vsyncpa %s8, 0
    %10 = vsyncpa [#allocation6], 0
    %11 = vsyncpa [#allocation4], 0
    %s12 = scalar_lea.sflag [#allocation4], 1
    %13 = vsyncpa %s12, 0
    loop: start=0, step=1, limit=4
    $region2: #{tpu_custom_call.1} parent=1 // loop_pre_header
      _
    $region3: #{tpu_custom_call.1} parent=1 // loop_header
      %s15 = sphi 0, %s19
      %p16 = scmp.ge.s32.totalorder %s15, 4
      %s25 = sphi 0, %s27
      %s28 = sphi 0, %s25
      %s29 = sphi 0, %s28
      %s45 = sphi 0, %s29
      %s49 = sphi 0, %s49
      %s51 = sphi 0, %s49
      %s52 = sphi 0, %s51
      %s66 = sphi 0, %s52
      %s72 = sphi 0, %s74
      %s75 = sphi 0, %s72
      %s76 = sphi 0, %s75
      %s92 = sphi 0, %s76
    $region4: #{tpu_custom_call.1} parent=1 // loop_header_branch
      %18 = sbr.rel (%p16) target = $region8
    $region5: #{tpu_custom_call.1} parent=1 // loop_body
      %s20 = ssub.s32 %s15, 1
      %s21 = ssub.s32 %s15, 2
      %s22 = sadd.s32 %s15, 1
      %s23 = ssub.s32 %s15, %s22
      %p24 = scmp.eq.s32.totalorder %s23, 0
      %s26 = sadd.s32 %s25, 1
      %s27 = scalar_select %p24, %s25, %s26
      %p30 = pneg %p24
      %p31 = scmp.eq.s32.totalorder %s15, 1
      %p32 = por %p30, %p31
      %p33 = scmp.ne.s32.totalorder %s25, %s28
      %p34 = scmp.eq.s32.totalorder %s15, 0
      %p35 = por %p33, %p34
      %p36 = scmp.ne.s32.totalorder %s25, %s28
      %p37 = scmp.eq.s32.totalorder %s20, 1
      %p38 = por %p36, %p37
      %p39 = scmp.ne.s32.totalorder %s28, %s29
      %p40 = scmp.eq.s32.totalorder %s20, 0
      %p41 = por %p39, %p40
      %p42 = scmp.ne.s32.totalorder %s28, %s29
      %p43 = scmp.eq.s32.totalorder %s21, 1
      %p44 = por %p42, %p43
      %p46 = scmp.ne.s32.totalorder %s29, %s45
      %p47 = scmp.eq.s32.totalorder %s21, 0
      %p48 = por %p46, %p47
      %s50 = sadd.s32 %s49, 1
      %p53 = scmp.eq.s32.totalorder %s15, 1
      %p54 = scmp.ne.s32.totalorder %s49, %s51
      %p55 = scmp.eq.s32.totalorder %s15, 0
      %p56 = por %p54, %p55
      %p57 = scmp.ne.s32.totalorder %s49, %s51
      %p58 = scmp.eq.s32.totalorder %s20, 1
      %p59 = por %p57, %p58
      %p60 = scmp.ne.s32.totalorder %s51, %s52
      %p61 = scmp.eq.s32.totalorder %s20, 0
      %p62 = por %p60, %p61
      %p63 = scmp.ne.s32.totalorder %s51, %s52
      %p64 = scmp.eq.s32.totalorder %s21, 1
      %p65 = por %p63, %p64
      %p67 = scmp.ne.s32.totalorder %s52, %s66
      %p68 = scmp.eq.s32.totalorder %s21, 0
      %p69 = por %p67, %p68
      %s70 = ssub.s32 %s15, %s22
      %p71 = scmp.eq.s32.totalorder %s70, 0
      %s73 = sadd.s32 %s72, 1
      %s74 = scalar_select %p71, %s72, %s73
      %p77 = pneg %p71
      %p78 = scmp.eq.s32.totalorder %s15, 1
      %p79 = por %p77, %p78
      %p80 = scmp.ne.s32.totalorder %s72, %s75
      %p81 = scmp.eq.s32.totalorder %s15, 0
      %p82 = por %p80, %p81
      %p83 = scmp.ne.s32.totalorder %s72, %s75
      %p84 = scmp.eq.s32.totalorder %s20, 1
      %p85 = por %p83, %p84
      %p86 = scmp.ne.s32.totalorder %s75, %s76
      %p87 = scmp.eq.s32.totalorder %s20, 0
      %p88 = por %p86, %p87
      %p89 = scmp.ne.s32.totalorder %s75, %s76
      %p90 = scmp.eq.s32.totalorder %s21, 1
      %p91 = por %p89, %p90
      %p93 = scmp.ne.s32.totalorder %s76, %s92
      %p94 = scmp.eq.s32.totalorder %s21, 0
      %p95 = por %p93, %p94
      %p96 = scmp.le.s32.totalorder 1, %s15
      %p97 = scmp.lt.s32.totalorder %s15, 3
      %p98 = pnand %p96, %p97
      %p99 = pneg %p98
      // Predicated region
      $region9: #{tpu_custom_call.1} parent=5 // pred_check
        _
      $region10: #{tpu_custom_call.1} parent=5 // pred_check_branch
        %101 = sbr.rel (%p98) target = $region12
      $region11: #{tpu_custom_call.1} parent=5 // pred_region
        %s102 = ssub.s32 %s15, 1
        // Predicated region
        $region13: #{tpu_custom_call.1} parent=11 // pred_check
          %p103 = pneg %p62
        $region14: #{tpu_custom_call.1} parent=11 // pred_check_branch
          %105 = sbr.rel (%p103) target = $region16
        $region15: #{tpu_custom_call.1} parent=11 // pred_region
          %s107 = ssub.s32 1024, 1024
          %108 = vsyncadd [#allocation6], %s107
          %s109 = sshll.u32 [#allocation5], 4
          %s110 = int_to_ptr.vmem [resolvable:$true] %s109
          %115 = dma.hbm_to_vmem [thread:$0]  %s1, 1024, %s110, [#allocation6], 128, 128, 8
        $region16: #{tpu_custom_call.1} parent=11 // pred_fallthru
          _
      $region12: #{tpu_custom_call.1} parent=5 // pred_fallthru
        _
      %p116 = scmp.lt.s32.totalorder %s15, 2
      // Predicated region
      $region17: #{tpu_custom_call.1} parent=5 // pred_check
        %p117 = pneg %p116
      $region18: #{tpu_custom_call.1} parent=5 // pred_check_branch
        %119 = sbr.rel (%p117) target = $region20
      $region19: #{tpu_custom_call.1} parent=5 // pred_region
        // Predicated region
        $region21: #{tpu_custom_call.1} parent=19 // pred_check
          %p120 = pneg %p35
        $region22: #{tpu_custom_call.1} parent=19 // pred_check_branch
          %122 = sbr.rel (%p120) target = $region24
        $region23: #{tpu_custom_call.1} parent=19 // pred_region
          %s123 = sand.u32 %s25, 1
          %s124 = scalar_lea.sflag [#allocation3], %s123
          %s125 = sand.u32 %s25, 1
          %s126 = scalar_lea.vmem [#allocation2], %s125
          %s128 = ssub.s32 16, 16
          %129 = vsyncadd %s124, %s128
          %s130 = smul.addr %s15, 16
          %s131 = scalar_lea.hbm %s0, %s130
          %s133 = sshll.u32 %s126, 4
          %s134 = int_to_ptr.vmem [resolvable:$true] %s133
          %136 = dma.hbm_to_vmem [thread:$0]  %s131, 16, %s134, %s124
        $region24: #{tpu_custom_call.1} parent=19 // pred_fallthru
          _
      $region20: #{tpu_custom_call.1} parent=5 // pred_fallthru
        _
      %p137 = scmp.le.s32.totalorder 1, %s15
      %p138 = scmp.lt.s32.totalorder %s15, 3
      %p139 = pnand %p137, %p138
      %p140 = pneg %p139
      // Predicated region
      $region25: #{tpu_custom_call.1} parent=5 // pred_check
        _
      $region26: #{tpu_custom_call.1} parent=5 // pred_check_branch
        %142 = sbr.rel (%p139) target = $region28
      $region27: #{tpu_custom_call.1} parent=5 // pred_region
        %s143 = ssub.s32 %s15, 1
        %s144 = sand.u32 %s28, 1
        %s145 = scalar_lea.sflag [#allocation3], %s144
        %s146 = sand.u32 %s28, 1
        %s147 = scalar_lea.vmem [#allocation2], %s146
        // Predicated region
        $region29: #{tpu_custom_call.1} parent=27 // pred_check
          %p148 = pneg %p41
        $region30: #{tpu_custom_call.1} parent=27 // pred_check_branch
          %150 = sbr.rel (%p148) target = $region32
        $region31: #{tpu_custom_call.1} parent=27 // pred_region
          %151 = dma.done %s145, 16
        $region32: #{tpu_custom_call.1} parent=27 // pred_fallthru
          _
        // Predicated region
        $region33: #{tpu_custom_call.1} parent=27 // pred_check
          %p152 = pneg %p62
        $region34: #{tpu_custom_call.1} parent=27 // pred_check_branch
          %154 = sbr.rel (%p152) target = $region36
        $region35: #{tpu_custom_call.1} parent=27 // pred_region
          %155 = dma.done [#allocation6], 1024
        $region36: #{tpu_custom_call.1} parent=27 // pred_fallthru
          _
        %s156 = sand.u32 %s28, 1
        %s157 = scalar_lea.sflag [#allocation3], %s156
        %s158 = sand.u32 %s28, 1
        %s159 = scalar_lea.vmem [#allocation2], %s158
        %p160 = pneg %p41
        %p161 = pneg %p38
        %p162 = pneg %p62
        %p163 = pneg %p59
        %p164 = pneg %p88
        %p165 = pneg %p85
        %s166 = sand.u32 %s75, 1
        %s167 = scalar_lea.sflag [#allocation4], %s166
        %s168 = sand.u32 %s75, 1
        %s169 = smul.addr %s168, 2
        %s170 = scalar_lea.vmem [#allocation7], %s169
        %v171 = vld [vmem:[%s147] sm:$0x1]
        %v172 = vld [vmem:[#allocation5] sm:$0xff]
        %v173 = vld [vmem:[#allocation5 + $0x8] sm:$0xff]
        %v174 = vld [vmem:[#allocation5 + $0x10] sm:$0xff]
        %v175 = vld [vmem:[#allocation5 + $0x18] sm:$0xff]
        %v176 = vld [vmem:[#allocation5 + $0x20] sm:$0xff]
        %v177 = vld [vmem:[#allocation5 + $0x28] sm:$0xff]
        %v178 = vld [vmem:[#allocation5 + $0x30] sm:$0xff]
        %v179 = vld [vmem:[#allocation5 + $0x38] sm:$0xf]
        %v180 = vld [vmem:[#allocation5 + $0x8] sm:$0xf]
        %v181 = vld [vmem:[#allocation5 + $0x3c] sm:$0x3]
        %v182 = vld [vmem:[#allocation5 + $0x3c] sm:$0x1]
        %184 = vset.pattern.permute.xlu0 0
        %185 = vperm.xlu0 %184, %v172
        %v186 = vpop.permute.xlu0 %185
        %189 = vset.pattern.permute.xlu0 0
        %190 = vperm.xlu0 %189, %v173
        %v191 = vpop.permute.xlu0 %190
        %194 = vset.pattern.permute.xlu0 0
        %195 = vperm.xlu0 %194, %v174
        %v196 = vpop.permute.xlu0 %195
        %199 = vset.pattern.permute.xlu0 0
        %200 = vperm.xlu0 %199, %v175
        %v201 = vpop.permute.xlu0 %200
        %204 = vset.pattern.permute.xlu0 0
        %205 = vperm.xlu0 %204, %v176
        %v206 = vpop.permute.xlu0 %205
        %209 = vset.pattern.permute.xlu0 0
        %210 = vperm.xlu0 %209, %v177
        %v211 = vpop.permute.xlu0 %210
        %214 = vset.pattern.permute.xlu0 0
        %215 = vperm.xlu0 %214, %v178
        %v216 = vpop.permute.xlu0 %215
        %219 = vset.pattern.permute.xlu0 0
        %220 = vperm.xlu0 %219, %v179
        %v221 = vpop.permute.xlu0 %220
        %v224 = vlaneseq
        %v225 = vshrl.u32 %v224, 7
        %v226 = vsub.s32 0, %v225
        %v227 = vrot.slane %v171, %v226
        %v229 = vmul.f32 %v186, %v227
        %v230 = vmul.f32 %v191, %v227
        %v231 = vmul.f32 %v196, %v227
        %v232 = vmul.f32 %v201, %v227
        %v233 = vmul.f32 %v206, %v227
        %v234 = vmul.f32 %v211, %v227
        %v235 = vmul.f32 %v216, %v227
        %v236 = vmul.f32 %v221, %v227
        %237 = vset.pattern.permute.xlu0 1
        %238 = vperm.xlu0 %237, %v172
        %v239 = vpop.permute.xlu0 %238
        %241 = vset.pattern.permute.xlu0 1
        %242 = vperm.xlu0 %241, %v173
        %v243 = vpop.permute.xlu0 %242
        %245 = vset.pattern.permute.xlu0 1
        %246 = vperm.xlu0 %245, %v174
        %v247 = vpop.permute.xlu0 %246
        %249 = vset.pattern.permute.xlu0 1
        %250 = vperm.xlu0 %249, %v175
        %v251 = vpop.permute.xlu0 %250
        %253 = vset.pattern.permute.xlu0 1
        %254 = vperm.xlu0 %253, %v176
        %v255 = vpop.permute.xlu0 %254
        %257 = vset.pattern.permute.xlu0 1
        %258 = vperm.xlu0 %257, %v177
        %v259 = vpop.permute.xlu0 %258
        %261 = vset.pattern.permute.xlu0 1
        %262 = vperm.xlu0 %261, %v178
        %v263 = vpop.permute.xlu0 %262
        %265 = vset.pattern.permute.xlu0 1
        %266 = vperm.xlu0 %265, %v179
        %v267 = vpop.permute.xlu0 %266
        %v269 = vadd.f32 %v229, %v239
        %v270 = vadd.f32 %v230, %v243
        %v271 = vadd.f32 %v231, %v247
        %v272 = vadd.f32 %v232, %v251
        %v273 = vadd.f32 %v233, %v255
        %v274 = vadd.f32 %v234, %v259
        %v275 = vadd.f32 %v235, %v263
        %v276 = vadd.f32 %v236, %v267
        %v277 = vtanh.pop %v269
        %v278 = vtanh.pop %v270
        %v279 = vtanh.pop %v271
        %v280 = vtanh.pop %v272
        %v281 = vtanh.pop %v273
        %v282 = vtanh.pop %v274
        %v283 = vtanh.pop %v275
        %v284 = vtanh.pop %v276
        %285 = vset.pattern.permute.xlu0 124
        %286 = vperm.xlu0 %285, %v172
        %v287 = vpop.permute.xlu0 %286
        %290 = vset.pattern.permute.xlu0 124
        %291 = vperm.xlu0 %290, %v180
        %v292 = vpop.permute.xlu0 %291
        %294 = vrot.lane.b32.xlu0 %v172, 64
        %v295 = vpop.permute.xlu0 %294
        %296 = vrot.lane.b32.xlu0 %v180, 64
        %v297 = vpop.permute.xlu0 %296
        %vm298 = vcmask 490496
        %v299 = vsel %vm298, %v295, 0
        %v301 = vsel %vm298, %v297, 0
        %vm303 = vcmask 1043456
        %v305 = vsel %vm303, %v284, 0
        %307 = vmatprep.subr.mxu0 0.0
        %308 = vmatpush1.msra.mxu0 %v277
        %309 = vmatprep.subr.mxu0 0.0
        %310 = vmatpush1.msra.mxu0 %v278
        %311 = vmatprep.subr.mxu0 0.0
        %312 = vmatpush1.msra.mxu0 %v279
        %313 = vmatprep.subr.mxu0 0.0
        %314 = vmatpush1.msra.mxu0 %v280
        %315 = vmatprep.subr.mxu0 0.0
        %316 = vmatpush1.msra.mxu0 %v281
        %317 = vmatprep.subr.mxu0 0.0
        %318 = vmatpush1.msra.mxu0 %v282
        %319 = vmatprep.subr.mxu0 0.0
        %320 = vmatpush1.msra.mxu0 %v283
        %321 = vmatprep.subr.mxu0 0.0
        %322 = vmatpush1.msra.mxu0 %v305
        %323 = vmatprep.subr.mxu0 0.0
        %324 = vmatpush1.msra.mxu0 0.0
        %325 = vmatprep.subr.mxu0 0.0
        %326 = vmatpush1.msra.mxu0 0.0
        %327 = vmatprep.subr.mxu0 0.0
        %328 = vmatpush1.msra.mxu0 0.0
        %329 = vmatprep.subr.mxu0 0.0
        %330 = vmatpush1.msra.mxu0 0.0
        %331 = vmatprep.subr.mxu0 0.0
        %332 = vmatpush1.msra.mxu0 0.0
        %333 = vmatprep.subr.mxu0 0.0
        %334 = vmatpush1.msra.mxu0 0.0
        %335 = vmatprep.subr.mxu0 0.0
        %336 = vmatpush1.msra.mxu0 0.0
        %337 = vmatprep.subr.mxu0 0.0
        %338 = vmatpush1.msra.mxu0 0.0
        %339 = vmatprep.subr.mxu0 0.0
        %340 = vmatpush1.msra.mxu0 0.0
        %341 = vmatprep.subr.mxu0 0.0
        %342 = vmatpush1.msra.mxu0 0.0
        %343 = vmatprep.subr.mxu0 0.0
        %344 = vmatpush1.msra.mxu0 0.0
        %345 = vmatprep.subr.mxu0 0.0
        %346 = vmatpush1.msra.mxu0 0.0
        %347 = vmatprep.subr.mxu0 0.0
        %348 = vmatpush1.msra.mxu0 0.0
        %349 = vmatprep.subr.mxu0 0.0
        %350 = vmatpush1.msra.mxu0 0.0
        %351 = vmatprep.subr.mxu0 0.0
        %352 = vmatpush1.msra.mxu0 0.0
        %353 = vmatprep.subr.mxu0 0.0
        %354 = vmatpush1.msra.mxu0 0.0
        %355 = vmatprep.subr.mxu0 0.0
        %356 = vmatpush1.msra.mxu0 0.0
        %357 = vmatprep.subr.mxu0 0.0
        %358 = vmatpush1.msra.mxu0 0.0
        %359 = vmatprep.subr.mxu0 0.0
        %360 = vmatpush1.msra.mxu0 0.0
        %361 = vmatprep.subr.mxu0 0.0
        %362 = vmatpush1.msra.mxu0 0.0
        %363 = vmatprep.subr.mxu0 0.0
        %364 = vmatpush1.msra.mxu0 0.0
        %365 = vmatprep.subr.mxu0 0.0
        %366 = vmatpush1.msra.mxu0 0.0
        %367 = vmatprep.subr.mxu0 0.0
        %368 = vmatpush1.msra.mxu0 0.0
        %369 = vmatprep.subr.mxu0 0.0
        %370 = vmatpush1.msra.mxu0 0.0
        %371 = vmatprep.mubr.f32.mxu0 0.0
        %372 = vmatmul.mubr.f32.gmra.mrb[0].mxu0 %v299
        %v373 = vpop.f32.mrb[0].mxu0
        %v374 = vadd.f32 %v287, %v373
        %v375 = vpop.f32.mrb[0].mxu0
        %376 = vmatprep.mubr.f32.mxu0 0.0
        %377 = vmatmul.mubr.f32.gmra.mrb[0].mxu0 %v301
        %v378 = vpop.f32.mrb[0].mxu0
        %v379 = vadd.f32 %v292, %v378
        %v380 = vpop.f32.mrb[0].mxu0
        %381 = vdwg.mxu0
        %v382 = vtanh.pop %v374
        %v383 = vtanh.pop %v379
        %385 = vset.pattern.permute.xlu0 16
        %386 = vperm.xlu0 %385, %v181
        %v387 = vpop.permute.xlu0 %386
        %vm389 = vcmask 97280
        %v390 = vsel %vm389, %v181, 0
        %v393 = vsel %vm303, %v383, 0
        %395 = vmatprep.subr.mxu0 0.0
        %396 = vmatpush1.msra.mxu0 %v382
        %397 = vmatprep.subr.mxu0 0.0
        %398 = vmatpush1.msra.mxu0 %v393
        %399 = vmatprep.subr.mxu0 0.0
        %400 = vmatpush1.msra.mxu0 0.0
        %401 = vmatprep.subr.mxu0 0.0
        %402 = vmatpush1.msra.mxu0 0.0
        %403 = vmatprep.subr.mxu0 0.0
        %404 = vmatpush1.msra.mxu0 0.0
        %405 = vmatprep.subr.mxu0 0.0
        %406 = vmatpush1.msra.mxu0 0.0
        %407 = vmatprep.subr.mxu0 0.0
        %408 = vmatpush1.msra.mxu0 0.0
        %409 = vmatprep.subr.mxu0 0.0
        %410 = vmatpush1.msra.mxu0 0.0
        %411 = vmatprep.subr.mxu0 0.0
        %412 = vmatpush1.msra.mxu0 0.0
        %413 = vmatprep.subr.mxu0 0.0
        %414 = vmatpush1.msra.mxu0 0.0
        %415 = vmatprep.subr.mxu0 0.0
        %416 = vmatpush1.msra.mxu0 0.0
        %417 = vmatprep.subr.mxu0 0.0
        %418 = vmatpush1.msra.mxu0 0.0
        %419 = vmatprep.subr.mxu0 0.0
        %420 = vmatpush1.msra.mxu0 0.0
        %421 = vmatprep.subr.mxu0 0.0
        %422 = vmatpush1.msra.mxu0 0.0
        %423 = vmatprep.subr.mxu0 0.0
        %424 = vmatpush1.msra.mxu0 0.0
        %425 = vmatprep.subr.mxu0 0.0
        %426 = vmatpush1.msra.mxu0 0.0
        %427 = vmatprep.subr.mxu0 0.0
        %428 = vmatpush1.msra.mxu0 0.0
        %429 = vmatprep.subr.mxu0 0.0
        %430 = vmatpush1.msra.mxu0 0.0
        %431 = vmatprep.subr.mxu0 0.0
        %432 = vmatpush1.msra.mxu0 0.0
        %433 = vmatprep.subr.mxu0 0.0
        %434 = vmatpush1.msra.mxu0 0.0
        %435 = vmatprep.subr.mxu0 0.0
        %436 = vmatpush1.msra.mxu0 0.0
        %437 = vmatprep.subr.mxu0 0.0
        %438 = vmatpush1.msra.mxu0 0.0
        %439 = vmatprep.subr.mxu0 0.0
        %440 = vmatpush1.msra.mxu0 0.0
        %441 = vmatprep.subr.mxu0 0.0
        %442 = vmatpush1.msra.mxu0 0.0
        %443 = vmatprep.subr.mxu0 0.0
        %444 = vmatpush1.msra.mxu0 0.0
        %445 = vmatprep.subr.mxu0 0.0
        %446 = vmatpush1.msra.mxu0 0.0
        %447 = vmatprep.subr.mxu0 0.0
        %448 = vmatpush1.msra.mxu0 0.0
        %449 = vmatprep.subr.mxu0 0.0
        %450 = vmatpush1.msra.mxu0 0.0
        %451 = vmatprep.subr.mxu0 0.0
        %452 = vmatpush1.msra.mxu0 0.0
        %453 = vmatprep.subr.mxu0 0.0
        %454 = vmatpush1.msra.mxu0 0.0
        %455 = vmatprep.subr.mxu0 0.0
        %456 = vmatpush1.msra.mxu0 0.0
        %457 = vmatprep.subr.mxu0 0.0
        %458 = vmatpush1.msra.mxu0 0.0
        %459 = vmatprep.mubr.f32.mxu0 0.0
        %460 = vmatmul.mubr.f32.gmra.mrb[0].mxu0 %v390
        %v461 = vpop.f32.mrb[0].mxu0
        %v462 = vadd.f32 %v387, %v461
        %v463 = vpop.f32.mrb[0].mxu0
        %464 = vdwg.mxu0
        %v465 = vlaneseq
        %v466 = vshrl.u32 %v465, 7
        %vm467 = vcmp.eq.s32.totalorder %v466, 0
        %v468 = vxor.u32 %v462, 2147483648
        %v469 = vmul.f32 %v468, 1.442695
        %v470 = vpow.pop %v469
        %v471 = vadd.f32 %v470, 1.0
        %v472 = vrcp.pop %v471
        %v473 = vmul.f32 1.0, %v472
        %475 = vrot.lane.b32.xlu0 %v182, 108
        %v476 = vpop.permute.xlu0 %475
        %s477 = vtos %v476
        %v478 = vstv %s477
        %v480 = vmul.f32 %v478, %v473
        %v481 = vsel %vm467, %v480, %v462
        %482 = vst [vmem:[%s170] sm:$0x3] %v481
        %s483 = sand.u32 %s75, 1
        %s484 = scalar_lea.sflag [#allocation4], %s483
        %s485 = sand.u32 %s75, 1
        %s486 = smul.addr %s485, 2
        %s487 = scalar_lea.vmem [#allocation7], %s486
        // Predicated region
        $region37: #{tpu_custom_call.1} parent=27 // pred_check
          %p488 = pneg %p85
        $region38: #{tpu_custom_call.1} parent=27 // pred_check_branch
          %490 = sbr.rel (%p488) target = $region40
        $region39: #{tpu_custom_call.1} parent=27 // pred_region
          %s492 = ssub.s32 32, 32
          %493 = vsyncadd %s484, %s492
          %s494 = smul.addr %s20, 32
          %s495 = scalar_lea.hbm %s2, %s494
          %s497 = sshll.u32 %s487, 4
          %s498 = int_to_ptr.vmem [resolvable:$true] %s497
          %500 = dma.vmem_to_hbm [thread:$0]  %s498, 32, %s495, %s484
        $region40: #{tpu_custom_call.1} parent=27 // pred_fallthru
          _
      $region28: #{tpu_custom_call.1} parent=5 // pred_fallthru
        _
      %p501 = scmp.le.s32.totalorder 2, %s15
      // Predicated region
      $region41: #{tpu_custom_call.1} parent=5 // pred_check
        %p502 = pneg %p501
      $region42: #{tpu_custom_call.1} parent=5 // pred_check_branch
        %504 = sbr.rel (%p502) target = $region44
      $region43: #{tpu_custom_call.1} parent=5 // pred_region
        %s505 = ssub.s32 %s15, 2
        // Predicated region
        $region45: #{tpu_custom_call.1} parent=43 // pred_check
          %p506 = pneg %p91
        $region46: #{tpu_custom_call.1} parent=43 // pred_check_branch
          %508 = sbr.rel (%p506) target = $region48
        $region47: #{tpu_custom_call.1} parent=43 // pred_region
          %s509 = sand.u32 %s76, 1
          %s510 = scalar_lea.sflag [#allocation4], %s509
          %s511 = sand.u32 %s76, 1
          %s512 = smul.addr %s511, 2
          %s513 = scalar_lea.vmem [#allocation7], %s512
          %514 = dma.done %s510, 32
        $region48: #{tpu_custom_call.1} parent=43 // pred_fallthru
          _
      $region44: #{tpu_custom_call.1} parent=5 // pred_fallthru
        _
    $region6: #{tpu_custom_call.1} parent=1 // loop_footer
      %s19 = sadd.s32 1, %s15
    $region7: #{tpu_custom_call.1} parent=1 // loop_footer_branch
      %14 = sbr.rel target = $region3
    $region8: #{tpu_custom_call.1} parent=1 // loop_exit
      _
    %515 = vsyncpa [#allocation3], 1
    %s516 = scalar_lea.sflag [#allocation3], 1
    %517 = vsyncpa %s516, 1
    %518 = vsyncpa [#allocation6], 1
    %519 = vsyncpa [#allocation4], 1
    %s520 = scalar_lea.sflag [#allocation4], 1
    %521 = vsyncpa %s520, 1

</llo_original>
